<compile_context>
chip_gen: v6e
topology: v6e:2x2x1
jax: 0.10.0
libtpu: 0.0.40
codegen_flags: <defaults>
</compile_context>

<pallas_src>
import functools

import jax
import jax.numpy as jnp
from jax.experimental import pallas as pl
from jax.experimental.pallas import tpu as pltpu


def _round_up(x, m):
    return (x + m - 1) // m * m


# -----------------------------------------------------------------------------
# Pallas kernel: full MLP forward for one batch tile.
# -----------------------------------------------------------------------------
def _critic_mlp_kernel(nlayers, *refs):
    """refs = (state_ref, action_ref,
               w0_s [size_s, W], w0_a [size_a, W], b0 [1, W],
               [w_i [W, W], b_i [1, W]  for hidden layers 1..nlayers-2],
               w_last_row [1, W], b_last [1, 1],     # only if nlayers > 1
               out_ref [TB, 1])"""
    s_ref, a_ref = refs[0], refs[1]
    out_ref = refs[-1]
    p = refs[2:-1]

    # Layer 0: split matmul replaces torch.cat([state, action], dim=1) @ W0.
    w0s, w0a, b0 = p[0][...], p[1][...], p[2][...]
    x = (
        jnp.dot(s_ref[...].astype(w0s.dtype), w0s, preferred_element_type=jnp.float32)
        + jnp.dot(a_ref[...].astype(w0a.dtype), w0a, preferred_element_type=jnp.float32)
        + b0.astype(jnp.float32)
    )
    idx = 3
    if nlayers > 1:
        x = jnp.maximum(x, 0.0)  # nn.ReLU after every layer but the last.

    # Hidden layers 1 .. nlayers-2 (MXU matmul + bias + ReLU), f32 accumulate.
    for _ in range(1, nlayers - 1):
        w, b = p[idx][...], p[idx + 1][...]
        idx += 2
        x = jnp.dot(x.astype(w.dtype), w, preferred_element_type=jnp.float32)
        x = jnp.maximum(x + b.astype(jnp.float32), 0.0)

    # Final layer (out width 1): VPU multiply + XLU lane-reduce; avoids an
    # MXU matmul that would use a single output column.
    if nlayers > 1:
        w_row, b_last = p[idx][...], p[idx + 1][...]  # [1, W], [1, 1]
        x = jnp.sum(x * w_row.astype(jnp.float32), axis=-1, keepdims=True)
        x = x + b_last.astype(jnp.float32)

    out_ref[...] = x.astype(out_ref.dtype)


# -----------------------------------------------------------------------------
# Wrapper: batch-tiled pallas_call.
# -----------------------------------------------------------------------------
def critic_forward(state, action, params, *, tile_batch=512):
    """Pallas forward of CriticNetwork.

    Args:
        state:  [B, size_s] float32
        action: [B, size_a] float32
        params: list of (W [in, out], b [1, out]) per linear layer
                (torch.nn.Linear weights transposed to [in, out]).
        tile_batch: max rows per grid step (sublane-aligned internally).

    Returns:
        [B, 1] float32 critic value.
    """
    nlayers = len(params)
    B, size_s = state.shape
    size_a = action.shape[1]

    # Batch tiling: sublane-aligned tile; pad the batch to a tile multiple and
    # slice the padding off the output (padded rows are just bias propagation).
    TB = min(tile_batch, _round_up(max(B, 1), 8))
    B_pad = _round_up(B, TB)
    if B_pad != B:
        state = jnp.pad(state, ((0, B_pad - B), (0, 0)))
        action = jnp.pad(action, ((0, B_pad - B), (0, 0)))

    # Flatten params: split layer 0 into state/action halves, and turn the
    # final [W, 1] weight into a [1, W] row vector for the in-kernel reduce.
    flat_params = []
    for i, (w, b) in enumerate(params):
        if i == 0:
            flat_params += [w[:size_s], w[size_s:], b]
        elif i == nlayers - 1:
            flat_params += [w.reshape(1, -1), b]
        else:
            flat_params += [w, b]

    grid = (B_pad // TB,)

    def act_spec(d):
        return pl.BlockSpec((TB, d), lambda i: (i, 0))

    # Constant index_map -> weight blocks are not re-fetched between steps.
    weight_specs = [pl.BlockSpec(p.shape, lambda i: (0, 0)) for p in flat_params]

    kernel = functools.partial(_critic_mlp_kernel, nlayers)

    out = pl.pallas_call(
        kernel,
        grid_spec=pltpu.PrefetchScalarGridSpec(
            num_scalar_prefetch=0,
            grid=grid,
            in_specs=[act_spec(size_s), act_spec(size_a)] + weight_specs,
            out_specs=pl.BlockSpec((TB, 1), lambda i: (i, 0)),
        ),
        out_shape=jax.ShapeDtypeStruct((B_pad, 1), jnp.float32),
        compiler_params=pltpu.CompilerParams(
            dimension_semantics=("parallel",),
        ),
    )(state, action, *flat_params)
    return out[:B]


# -----------------------------------------------------------------------------
# Deterministic parameter init (mimics torch.nn.Linear default: U(-k, k),
# k = 1/sqrt(fan_in)).  Weights stored already transposed as [in, out].
# NOTE: if the model is tunable, prefer layer_width as a multiple of 128 for
# lane-aligned (unmasked) vector loads/stores and fuller MXU columns.
# -----------------------------------------------------------------------------
def init_critic_params(key, size_s, size_a, nlayers, layer_width):
    params = []
    for i in range(nlayers):
        size_in = size_s + size_a if i == 0 else layer_width
        size_out = 1 if i == nlayers - 1 else layer_width
        key, kw, kb = jax.random.split(key, 3)
        bound = 1.0 / jnp.sqrt(jnp.float32(size_in))
        w = jax.random.uniform(kw, (size_in, size_out), jnp.float32, -bound, bound)
        b = jax.random.uniform(kb, (1, size_out), jnp.float32, -bound, bound)
        params.append((w, b))
    return params


def critic_forward_ref(state, action, params):
    """Pure-JAX reference for correctness check."""
    x = jnp.concatenate([state, action], axis=1)
    n = len(params)
    for i, (w, b) in enumerate(params):
        x = x @ w + b
        if i != n - 1:
            x = jnp.maximum(x, 0.0)
    return x


if __name__ == "__main__":
    # Small shapes consistent with the module.
    size_s = 12
    size_a = 4
    nlayers = 3
    layer_width = 32

    key = jax.random.PRNGKey(0)
    k_state, k_action, k_params = jax.random.split(key, 3)
    params = init_critic_params(k_params, size_s, size_a, nlayers, layer_width)

    # Case 1: tiny batch (exercises batch padding to the sublane tile).
    batch = 2
    state = jax.random.normal(k_state, (batch, size_s), jnp.float32)
    action = jax.random.normal(k_action, (batch, size_a), jnp.float32)
    out = jax.block_until_ready(critic_forward(state, action, params))
    ref = critic_forward_ref(state, action, params)
    assert out.shape == (batch, 1), out.shape
    assert jnp.allclose(out, ref, atol=1e-5, rtol=1e-5), (out, ref)

    # Case 2: non-tile-multiple batch (exercises padding + multi-step grid).
    batch2 = 37
    k_s2, k_a2 = jax.random.split(jax.random.PRNGKey(1))
    state2 = jax.random.normal(k_s2, (batch2, size_s), jnp.float32)
    action2 = jax.random.normal(k_a2, (batch2, size_a), jnp.float32)
    out2 = jax.block_until_ready(critic_forward(state2, action2, params, tile_batch=16))
    ref2 = critic_forward_ref(state2, action2, params)
    assert out2.shape == (batch2, 1), out2.shape
    assert jnp.allclose(out2, ref2, atol=1e-5, rtol=1e-5), (out2, ref2)

    print("KERNEL_OK")
</pallas_src>

<mosaic_0001>
module attributes {stable_mosaic.version = 11 : i64} {
  func.func @_critic_mlp_kernel(%arg0: i32, %arg1: memref<8x12xf32, #tpu.memory_space<vmem>>, %arg2: memref<8x4xf32, #tpu.memory_space<vmem>>, %arg3: memref<12x32xf32, #tpu.memory_space<vmem>>, %arg4: memref<4x32xf32, #tpu.memory_space<vmem>>, %arg5: memref<1x32xf32, #tpu.memory_space<vmem>>, %arg6: memref<32x32xf32, #tpu.memory_space<vmem>>, %arg7: memref<1x32xf32, #tpu.memory_space<vmem>>, %arg8: memref<1x32xf32, #tpu.memory_space<vmem>>, %arg9: memref<1x1xf32, #tpu.memory_space<vmem>>, %arg10: memref<8x1xf32, #tpu.memory_space<vmem>>) attributes {dimension_semantics = [#tpu.dimension_semantics<parallel>], iteration_bounds = array<i64: 1>, scalar_prefetch = 0 : i64, scratch_operands = 0 : i64, tpu.core_type = #tpu.core_type<tc>, window_params = [{transform_indices = @transform_0, window_bounds = array<i64: 8, 12>}, {transform_indices = @transform_1, window_bounds = array<i64: 8, 4>}, {pipeline_mode = #tpu.pipeline_mode<synchronous>, transform_indices = @transform_2, window_bounds = array<i64: 12, 32>}, {pipeline_mode = #tpu.pipeline_mode<synchronous>, transform_indices = @transform_3, window_bounds = array<i64: 4, 32>}, {pipeline_mode = #tpu.pipeline_mode<synchronous>, transform_indices = @transform_4, window_bounds = array<i64: 1, 32>}, {pipeline_mode = #tpu.pipeline_mode<synchronous>, transform_indices = @transform_5, window_bounds = array<i64: 32, 32>}, {pipeline_mode = #tpu.pipeline_mode<synchronous>, transform_indices = @transform_6, window_bounds = array<i64: 1, 32>}, {pipeline_mode = #tpu.pipeline_mode<synchronous>, transform_indices = @transform_7, window_bounds = array<i64: 1, 32>}, {pipeline_mode = #tpu.pipeline_mode<synchronous>, transform_indices = @transform_8, window_bounds = array<i64: 1, 1>}, {transform_indices = @transform_9, window_bounds = array<i64: 8, 1>}]} {
    %c0 = arith.constant 0 : index
    %c0_0 = arith.constant 0 : index
    %0 = vector.load %arg3[%c0, %c0_0] : memref<12x32xf32, #tpu.memory_space<vmem>>, vector<12x32xf32>
    %c0_1 = arith.constant 0 : index
    %c0_2 = arith.constant 0 : index
    %1 = vector.load %arg4[%c0_1, %c0_2] : memref<4x32xf32, #tpu.memory_space<vmem>>, vector<4x32xf32>
    %c0_3 = arith.constant 0 : index
    %c0_4 = arith.constant 0 : index
    %2 = vector.load %arg5[%c0_3, %c0_4] : memref<1x32xf32, #tpu.memory_space<vmem>>, vector<1x32xf32>
    %c0_5 = arith.constant 0 : index
    %c0_6 = arith.constant 0 : index
    %3 = vector.load %arg1[%c0_5, %c0_6] : memref<8x12xf32, #tpu.memory_space<vmem>>, vector<8x12xf32>
    %cst = arith.constant dense<0.000000e+00> : vector<8x32xf32>
    %4 = tpu.matmul %3, %0, %cst {dimension_numbers = #tpu.dot_dimension_numbers<[1], [0], [0], [1], [0, 0, 1, 1], [], []>} : vector<8x12xf32>, vector<12x32xf32>, vector<8x32xf32> -> vector<8x32xf32>
    %c0_7 = arith.constant 0 : index
    %c0_8 = arith.constant 0 : index
    %5 = vector.load %arg2[%c0_7, %c0_8] : memref<8x4xf32, #tpu.memory_space<vmem>>, vector<8x4xf32>
    %cst_9 = arith.constant dense<0.000000e+00> : vector<8x32xf32>
    %6 = tpu.matmul %5, %1, %cst_9 {dimension_numbers = #tpu.dot_dimension_numbers<[1], [0], [0], [1], [0, 0, 1, 1], [], []>} : vector<8x4xf32>, vector<4x32xf32>, vector<8x32xf32> -> vector<8x32xf32>
    %7 = arith.addf %4, %6 : vector<8x32xf32>
    %8 = vector.broadcast %2 : vector<1x32xf32> to vector<8x32xf32>
    %9 = arith.addf %7, %8 : vector<8x32xf32>
    %cst_10 = arith.constant 0.000000e+00 : f32
    %10 = vector.broadcast %cst_10 : f32 to vector<8x32xf32>
    %11 = arith.maximumf %9, %10 : vector<8x32xf32>
    %c0_11 = arith.constant 0 : index
    %c0_12 = arith.constant 0 : index
    %12 = vector.load %arg6[%c0_11, %c0_12] : memref<32x32xf32, #tpu.memory_space<vmem>>, vector<32x32xf32>
    %c0_13 = arith.constant 0 : index
    %c0_14 = arith.constant 0 : index
    %13 = vector.load %arg7[%c0_13, %c0_14] : memref<1x32xf32, #tpu.memory_space<vmem>>, vector<1x32xf32>
    %cst_15 = arith.constant dense<0.000000e+00> : vector<8x32xf32>
    %14 = tpu.matmul %11, %12, %cst_15 {dimension_numbers = #tpu.dot_dimension_numbers<[1], [0], [0], [1], [0, 0, 1, 1], [], []>} : vector<8x32xf32>, vector<32x32xf32>, vector<8x32xf32> -> vector<8x32xf32>
    %15 = vector.broadcast %13 : vector<1x32xf32> to vector<8x32xf32>
    %16 = arith.addf %14, %15 : vector<8x32xf32>
    %cst_16 = arith.constant 0.000000e+00 : f32
    %17 = vector.broadcast %cst_16 : f32 to vector<8x32xf32>
    %18 = arith.maximumf %16, %17 : vector<8x32xf32>
    %c0_17 = arith.constant 0 : index
    %c0_18 = arith.constant 0 : index
    %19 = vector.load %arg8[%c0_17, %c0_18] : memref<1x32xf32, #tpu.memory_space<vmem>>, vector<1x32xf32>
    %c0_19 = arith.constant 0 : index
    %c0_20 = arith.constant 0 : index
    %20 = vector.load %arg9[%c0_19, %c0_20] : memref<1x1xf32, #tpu.memory_space<vmem>>, vector<1x1xf32>
    %21 = vector.broadcast %19 : vector<1x32xf32> to vector<8x32xf32>
    %22 = arith.mulf %18, %21 : vector<8x32xf32>
    %cst_21 = arith.constant dense<0.000000e+00> : vector<8xf32>
    %23 = vector.multi_reduction <add>, %22, %cst_21 [1] : vector<8x32xf32> to vector<8xf32>
    %24 = vector.shape_cast %23 : vector<8xf32> to vector<8x1xf32>
    %25 = vector.broadcast %20 : vector<1x1xf32> to vector<8x1xf32>
    %26 = arith.addf %24, %25 : vector<8x1xf32>
    %c0_22 = arith.constant 0 : index
    %c0_23 = arith.constant 0 : index
    %27 = vector.load %arg10[%c0_22, %c0_23] : memref<8x1xf32, #tpu.memory_space<vmem>>, vector<8x1xf32>
    tpu.vector_store %arg10[%c0_22, %c0_23], %26 {strides = array<i32>} : memref<8x1xf32, #tpu.memory_space<vmem>>, vector<8x1xf32>,
    return
  }
  func.func @transform_0(%arg0: i32) -> (i32, i32) {
    %c0_i32 = arith.constant 0 : i32
    %c0_i32_0 = arith.constant 0 : i32
    return %arg0, %c0_i32 : i32, i32
  }
  func.func @transform_1(%arg0: i32) -> (i32, i32) {
    %c0_i32 = arith.constant 0 : i32
    %c0_i32_0 = arith.constant 0 : i32
    return %arg0, %c0_i32 : i32, i32
  }
  func.func @transform_2(%arg0: i32) -> (i32, i32) {
    %c0_i32 = arith.constant 0 : i32
    %c0_i32_0 = arith.constant 0 : i32
    %c0_i32_1 = arith.constant 0 : i32
    return %c0_i32, %c0_i32_0 : i32, i32
  }
  func.func @transform_3(%arg0: i32) -> (i32, i32) {
    %c0_i32 = arith.constant 0 : i32
    %c0_i32_0 = arith.constant 0 : i32
    %c0_i32_1 = arith.constant 0 : i32
    return %c0_i32, %c0_i32_0 : i32, i32
  }
  func.func @transform_4(%arg0: i32) -> (i32, i32) {
    %c0_i32 = arith.constant 0 : i32
    %c0_i32_0 = arith.constant 0 : i32
    %c0_i32_1 = arith.constant 0 : i32
    return %c0_i32, %c0_i32_0 : i32, i32
  }
  func.func @transform_5(%arg0: i32) -> (i32, i32) {
    %c0_i32 = arith.constant 0 : i32
    %c0_i32_0 = arith.constant 0 : i32
    %c0_i32_1 = arith.constant 0 : i32
    return %c0_i32, %c0_i32_0 : i32, i32
  }
  func.func @transform_6(%arg0: i32) -> (i32, i32) {
    %c0_i32 = arith.constant 0 : i32
    %c0_i32_0 = arith.constant 0 : i32
    %c0_i32_1 = arith.constant 0 : i32
    return %c0_i32, %c0_i32_0 : i32, i32
  }
  func.func @transform_7(%arg0: i32) -> (i32, i32) {
    %c0_i32 = arith.constant 0 : i32
    %c0_i32_0 = arith.constant 0 : i32
    %c0_i32_1 = arith.constant 0 : i32
    return %c0_i32, %c0_i32_0 : i32, i32
  }
  func.func @transform_8(%arg0: i32) -> (i32, i32) {
    %c0_i32 = arith.constant 0 : i32
    %c0_i32_0 = arith.constant 0 : i32
    %c0_i32_1 = arith.constant 0 : i32
    return %c0_i32, %c0_i32_0 : i32, i32
  }
  func.func @transform_9(%arg0: i32) -> (i32, i32) {
    %c0_i32 = arith.constant 0 : i32
    %c0_i32_0 = arith.constant 0 : i32
    return %arg0, %c0_i32 : i32, i32
  }
}

</mosaic_0001>

<llo_original>
// kernel: tpu_custom_call.1
$region0: #{tpu_custom_call.1}
  #allocation0 [shape = 'u32[]', space=smem, size = 0x4, offset = 0x4, fixed_abs, tag = 'smem constant byte address 0x4 - core index']
  #allocation1 [shape = 'u32[144,128]{1,0:T(1,128)}', space=vmem, size = 0x12000, scoped, tag = 'internal scratch']
  #allocation2 [shape = 'f32[1,1]{1,0:T(1,128)S(1)}', space=vmem, size = 0x200, scoped, tag = 'scoped memory for tpu_custom_call.1']
  %s0 = inlined_call_operand.hbm [shape: f32[8,12], index: 0, kind: input, shape index: {}]
  %s1 = inlined_call_operand.vmem [shape: f32[8,4], index: 1, kind: input, shape index: {}]
  %s2 = inlined_call_operand.vmem [shape: f32[12,32], index: 2, kind: input, shape index: {}]
  %s3 = inlined_call_operand.hbm [shape: f32[4,32], index: 3, kind: input, shape index: {}]
  %s4 = inlined_call_operand.vmem [shape: f32[1,32], index: 4, kind: input, shape index: {}]
  %s5 = inlined_call_operand.hbm [shape: f32[32,32], index: 5, kind: input, shape index: {}]
  %s6 = inlined_call_operand.vmem [shape: f32[1,32], index: 6, kind: input, shape index: {}]
  %s7 = inlined_call_operand.vmem [shape: f32[1,32], index: 7, kind: input, shape index: {}]
  %s8 = inlined_call_operand.<no memory space> [shape: f32[1,1], index: 8, kind: input, shape index: {}]
  %s9 = inlined_call_operand.vmem [shape: f32[8,1], index: 9, kind: output, shape index: {}]
  %s10 = sld [smem:[#allocation0]]
  $region58: #{tpu_custom_call.1} parent=0
    _
  %s12 = ssub.s32 1, %s10
  %s13 = scalar_select 0, %s12, %s10
  %v14 = vstv %s8
  %15 = vst [vmem:[#allocation2] sm:$0x1] %v14
  $region1: #{tpu_custom_call.1} parent=0
    #allocation3 [shape = 'u8[4096]{0}', space=vmem, size = 0x1000, scoped, tag = 'input window, operand 0, single buffered']
    #allocation4 [shape = 's32[1]{0}', space=sflag, size = 0x4, scoped, tag = 'scoped memory for tpu_custom_call.1']
    #allocation5 [shape = 'u8[2048]{0}', space=vmem, size = 0x800, scoped, tag = 'input window, operand 3, single buffered']
    #allocation6 [shape = 's32[1]{0}', space=sflag, size = 0x4, scoped, tag = 'scoped memory for tpu_custom_call.1']
    #allocation7 [shape = 'u8[16384]{0}', space=vmem, size = 0x4000, scoped, tag = 'input window, operand 5, single buffered']
    %16 = vsyncpa [#allocation4], 0
    %17 = vsyncpa [#allocation6], 0
    // Predicated region
    $region2: #{tpu_custom_call.1} parent=1 // pred_check
      _
    $region3: #{tpu_custom_call.1} parent=1 // pred_check_branch
      %19 = sbr.rel (0) target = $region5
    $region4: #{tpu_custom_call.1} parent=1 // pred_region
      %s21 = ssub.s32 128, 128
      %22 = vsyncadd [#allocation4], %s21
      %s24 = sshll.u32 [#allocation3], 4
      %s25 = int_to_ptr.vmem [resolvable:$true] %s24
      %27 = dma.hbm_to_vmem [thread:$0]  %s0, 128, %s25, [#allocation4]
    $region5: #{tpu_custom_call.1} parent=1 // pred_fallthru
      _
    // Predicated region
    $region6: #{tpu_custom_call.1} parent=1 // pred_check
      _
    $region7: #{tpu_custom_call.1} parent=1 // pred_check_branch
      %29 = sbr.rel (0) target = $region9
    $region8: #{tpu_custom_call.1} parent=1 // pred_region
      _
    $region9: #{tpu_custom_call.1} parent=1 // pred_fallthru
      _
    // Predicated region
    $region10: #{tpu_custom_call.1} parent=1 // pred_check
      _
    $region11: #{tpu_custom_call.1} parent=1 // pred_check_branch
      %31 = sbr.rel (0) target = $region13
    $region12: #{tpu_custom_call.1} parent=1 // pred_region
      _
    $region13: #{tpu_custom_call.1} parent=1 // pred_fallthru
      _
    // Predicated region
    $region14: #{tpu_custom_call.1} parent=1 // pred_check
      _
    $region15: #{tpu_custom_call.1} parent=1 // pred_check_branch
      %33 = sbr.rel (0) target = $region17
    $region16: #{tpu_custom_call.1} parent=1 // pred_region
      %s35 = ssub.s32 64, 64
      %36 = vsyncadd [#allocation6], %s35
      %s38 = sshll.u32 [#allocation5], 4
      %s39 = int_to_ptr.vmem [resolvable:$true] %s38
      %41 = dma.hbm_to_vmem [thread:$0]  %s3, 64, %s39, [#allocation6]
    $region17: #{tpu_custom_call.1} parent=1 // pred_fallthru
      _
    // Predicated region
    $region18: #{tpu_custom_call.1} parent=1 // pred_check
      _
    $region19: #{tpu_custom_call.1} parent=1 // pred_check_branch
      %43 = sbr.rel (0) target = $region21
    $region20: #{tpu_custom_call.1} parent=1 // pred_region
      _
    $region21: #{tpu_custom_call.1} parent=1 // pred_fallthru
      _
    // Predicated region
    $region22: #{tpu_custom_call.1} parent=1 // pred_check
      _
    $region23: #{tpu_custom_call.1} parent=1 // pred_check_branch
      %45 = sbr.rel (0) target = $region25
    $region24: #{tpu_custom_call.1} parent=1 // pred_region
      %s47 = ssub.s32 512, 512
      %48 = vsyncadd [#allocation6], %s47
      %s49 = sshll.u32 [#allocation7], 4
      %s50 = int_to_ptr.vmem [resolvable:$true] %s49
      %55 = dma.hbm_to_vmem [thread:$0]  %s5, 512, %s50, [#allocation6], 128, 128, 8
    $region25: #{tpu_custom_call.1} parent=1 // pred_fallthru
      _
    // Predicated region
    $region26: #{tpu_custom_call.1} parent=1 // pred_check
      _
    $region27: #{tpu_custom_call.1} parent=1 // pred_check_branch
      %57 = sbr.rel (0) target = $region29
    $region28: #{tpu_custom_call.1} parent=1 // pred_region
      _
    $region29: #{tpu_custom_call.1} parent=1 // pred_fallthru
      _
    // Predicated region
    $region30: #{tpu_custom_call.1} parent=1 // pred_check
      _
    $region31: #{tpu_custom_call.1} parent=1 // pred_check_branch
      %59 = sbr.rel (0) target = $region33
    $region32: #{tpu_custom_call.1} parent=1 // pred_region
      _
    $region33: #{tpu_custom_call.1} parent=1 // pred_fallthru
      _
    // Predicated region
    $region34: #{tpu_custom_call.1} parent=1 // pred_check
      _
    $region35: #{tpu_custom_call.1} parent=1 // pred_check_branch
      %61 = sbr.rel (0) target = $region37
    $region36: #{tpu_custom_call.1} parent=1 // pred_region
      _
    $region37: #{tpu_custom_call.1} parent=1 // pred_fallthru
      _
    // Predicated region
    $region38: #{tpu_custom_call.1} parent=1 // pred_check
      _
    $region39: #{tpu_custom_call.1} parent=1 // pred_check_branch
      %63 = sbr.rel (0) target = $region41
    $region40: #{tpu_custom_call.1} parent=1 // pred_region
      %64 = dma.done [#allocation4], 128
    $region41: #{tpu_custom_call.1} parent=1 // pred_fallthru
      _
    // Predicated region
    $region42: #{tpu_custom_call.1} parent=1 // pred_check
      _
    $region43: #{tpu_custom_call.1} parent=1 // pred_check_branch
      %66 = sbr.rel (0) target = $region45
    $region44: #{tpu_custom_call.1} parent=1 // pred_region
      %67 = dma.done [#allocation6], 64
    $region45: #{tpu_custom_call.1} parent=1 // pred_fallthru
      _
    // Predicated region
    $region46: #{tpu_custom_call.1} parent=1 // pred_check
      _
    $region47: #{tpu_custom_call.1} parent=1 // pred_check_branch
      %69 = sbr.rel (0) target = $region49
    $region48: #{tpu_custom_call.1} parent=1 // pred_region
      %70 = dma.done [#allocation6], 512
    $region49: #{tpu_custom_call.1} parent=1 // pred_fallthru
      _
    %v71 = vld [vmem:[%s2] sm:$0xff]
    %v72 = vld [vmem:[%s2 + $0x8] sm:$0xf]
    %v73 = vld [vmem:[#allocation5] sm:$0xf]
    %v74 = vld [vmem:[%s4] sm:$0x1]
    %v75 = vld [vmem:[#allocation3] sm:$0xff]
    %v76 = vld [vmem:[%s1] sm:$0xff]
    %vm77 = vcmask 31744
    %v79 = vsel %vm77, %v76, 0
    %vm81 = vcmask 1043456
    %v83 = vsel %vm81, %v73, 0
    %85 = vmatprep.subr.mxu0 0.0
    %86 = vmatpush1.msra.mxu0 0.0
    %87 = vmatprep.subr.mxu0 0.0
    %88 = vmatpush1.msra.mxu0 0.0
    %89 = vmatprep.subr.mxu0 0.0
    %90 = vmatpush1.msra.mxu0 0.0
    %91 = vmatprep.subr.mxu0 0.0
    %92 = vmatpush1.msra.mxu0 0.0
    %93 = vmatprep.subr.mxu0 0.0
    %94 = vmatpush1.msra.mxu0 0.0
    %95 = vmatprep.subr.mxu0 0.0
    %96 = vmatpush1.msra.mxu0 0.0
    %97 = vmatprep.subr.mxu0 0.0
    %98 = vmatpush1.msra.mxu0 0.0
    %99 = vmatprep.subr.mxu0 0.0
    %100 = vmatpush1.msra.mxu0 0.0
    %101 = vmatprep.subr.mxu0 0.0
    %102 = vmatpush1.msra.mxu0 0.0
    %103 = vmatprep.subr.mxu0 0.0
    %104 = vmatpush1.msra.mxu0 0.0
    %105 = vmatprep.subr.mxu0 0.0
    %106 = vmatpush1.msra.mxu0 0.0
    %107 = vmatprep.subr.mxu0 0.0
    %108 = vmatpush1.msra.mxu0 0.0
    %109 = vmatprep.subr.mxu0 0.0
    %110 = vmatpush1.msra.mxu0 0.0
    %111 = vmatprep.subr.mxu0 0.0
    %112 = vmatpush1.msra.mxu0 0.0
    %113 = vmatprep.subr.mxu0 0.0
    %114 = vmatpush1.msra.mxu0 0.0
    %115 = vmatprep.subr.mxu0 0.0
    %116 = vmatpush1.msra.mxu0 %v83
    %117 = vmatprep.subr.mxu0 0.0
    %118 = vmatpush2.msra.mxu0 0.0
    %119 = vmatprep.subr.mxu0 0.0
    %120 = vmatpush2.msra.mxu0 0.0
    %121 = vmatprep.subr.mxu0 0.0
    %122 = vmatpush2.msra.mxu0 0.0
    %123 = vmatprep.subr.mxu0 0.0
    %124 = vmatpush2.msra.mxu0 0.0
    %125 = vmatprep.subr.mxu0 0.0
    %126 = vmatpush2.msra.mxu0 0.0
    %127 = vmatprep.subr.mxu0 0.0
    %128 = vmatpush2.msra.mxu0 0.0
    %129 = vmatprep.subr.mxu0 0.0
    %130 = vmatpush2.msra.mxu0 0.0
    %131 = vmatprep.subr.mxu0 0.0
    %132 = vmatpush2.msra.mxu0 0.0
    %133 = vmatprep.subr.mxu0 0.0
    %134 = vmatpush2.msra.mxu0 0.0
    %135 = vmatprep.subr.mxu0 0.0
    %136 = vmatpush2.msra.mxu0 0.0
    %137 = vmatprep.subr.mxu0 0.0
    %138 = vmatpush2.msra.mxu0 0.0
    %139 = vmatprep.subr.mxu0 0.0
    %140 = vmatpush2.msra.mxu0 0.0
    %141 = vmatprep.subr.mxu0 0.0
    %142 = vmatpush2.msra.mxu0 0.0
    %143 = vmatprep.subr.mxu0 0.0
    %144 = vmatpush2.msra.mxu0 0.0
    %145 = vmatprep.subr.mxu0 0.0
    %146 = vmatpush2.msra.mxu0 0.0
    %147 = vmatprep.subr.mxu0 0.0
    %148 = vmatpush2.msra.mxu0 0.0
    %149 = vmatprep.mubr.f32.mxu0 0.0
    %150 = vmatmul.mubr.f32.gmra.mxu0 %v79
    %v151 = vpop.f32.mrf.mxu0
    %v152 = vadd.f32 0.0, %v151
    %v153 = vpop.f32.mrf.mxu0
    %154 = vdwg.mxu0
    %vm155 = vcmask 97280
    %v157 = vsel %vm155, %v75, 0
    %v160 = vsel %vm81, %v72, 0
    %162 = vmatprep.subr.mxu0 0.0
    %163 = vmatpush1.msra.mxu0 0.0
    %164 = vmatprep.subr.mxu0 0.0
    %165 = vmatpush1.msra.mxu0 0.0
    %166 = vmatprep.subr.mxu0 0.0
    %167 = vmatpush1.msra.mxu0 0.0
    %168 = vmatprep.subr.mxu0 0.0
    %169 = vmatpush1.msra.mxu0 0.0
    %170 = vmatprep.subr.mxu0 0.0
    %171 = vmatpush1.msra.mxu0 0.0
    %172 = vmatprep.subr.mxu0 0.0
    %173 = vmatpush1.msra.mxu0 0.0
    %174 = vmatprep.subr.mxu0 0.0
    %175 = vmatpush1.msra.mxu0 0.0
    %176 = vmatprep.subr.mxu0 0.0
    %177 = vmatpush1.msra.mxu0 0.0
    %178 = vmatprep.subr.mxu0 0.0
    %179 = vmatpush1.msra.mxu0 0.0
    %180 = vmatprep.subr.mxu0 0.0
    %181 = vmatpush1.msra.mxu0 0.0
    %182 = vmatprep.subr.mxu0 0.0
    %183 = vmatpush1.msra.mxu0 0.0
    %184 = vmatprep.subr.mxu0 0.0
    %185 = vmatpush1.msra.mxu0 0.0
    %186 = vmatprep.subr.mxu0 0.0
    %187 = vmatpush1.msra.mxu0 0.0
    %188 = vmatprep.subr.mxu0 0.0
    %189 = vmatpush1.msra.mxu0 0.0
    %190 = vmatprep.subr.mxu0 0.0
    %191 = vmatpush1.msra.mxu0 %v160
    %192 = vmatprep.subr.mxu0 0.0
    %193 = vmatpush1.msra.mxu0 %v71
    %194 = vmatprep.subr.mxu0 0.0
    %195 = vmatpush2.msra.mxu0 0.0
    %196 = vmatprep.subr.mxu0 0.0
    %197 = vmatpush2.msra.mxu0 0.0
    %198 = vmatprep.subr.mxu0 0.0
    %199 = vmatpush2.msra.mxu0 0.0
    %200 = vmatprep.subr.mxu0 0.0
    %201 = vmatpush2.msra.mxu0 0.0
    %202 = vmatprep.subr.mxu0 0.0
    %203 = vmatpush2.msra.mxu0 0.0
    %204 = vmatprep.subr.mxu0 0.0
    %205 = vmatpush2.msra.mxu0 0.0
    %206 = vmatprep.subr.mxu0 0.0
    %207 = vmatpush2.msra.mxu0 0.0
    %208 = vmatprep.subr.mxu0 0.0
    %209 = vmatpush2.msra.mxu0 0.0
    %210 = vmatprep.subr.mxu0 0.0
    %211 = vmatpush2.msra.mxu0 0.0
    %212 = vmatprep.subr.mxu0 0.0
    %213 = vmatpush2.msra.mxu0 0.0
    %214 = vmatprep.subr.mxu0 0.0
    %215 = vmatpush2.msra.mxu0 0.0
    %216 = vmatprep.subr.mxu0 0.0
    %217 = vmatpush2.msra.mxu0 0.0
    %218 = vmatprep.subr.mxu0 0.0
    %219 = vmatpush2.msra.mxu0 0.0
    %220 = vmatprep.subr.mxu0 0.0
    %221 = vmatpush2.msra.mxu0 0.0
    %222 = vmatprep.subr.mxu0 0.0
    %223 = vmatpush2.msra.mxu0 0.0
    %224 = vmatprep.subr.mxu0 0.0
    %225 = vmatpush2.msra.mxu0 0.0
    %226 = vmatprep.mubr.f32.mxu0 0.0
    %227 = vmatmul.mubr.f32.gmra.mxu0 %v157
    %v228 = vpop.f32.mrf.mxu0
    %v229 = vadd.f32 %v152, %v228
    %v230 = vpop.f32.mrf.mxu0
    %231 = vdwg.mxu0
    %v233 = vlaneseq
    %v234 = vshrl.u32 %v233, 7
    %v235 = vsub.s32 0, %v234
    %v236 = vrot.slane %v74, %v235
    %v238 = vadd.f32 %v229, %v236
    %v239 = vmax.f32 %v238, 0.0
    %v240 = vld [vmem:[#allocation7] sm:$0xff]
    %v241 = vld [vmem:[#allocation7 + $0x8] sm:$0xff]
    %v242 = vld [vmem:[#allocation7 + $0x10] sm:$0xff]
    %v243 = vld [vmem:[#allocation7 + $0x18] sm:$0xff]
    %v244 = vld [vmem:[%s6] sm:$0x1]
    %v246 = vlaneseq
    %v247 = vshrl.u32 %v246, 7
    %v248 = vsub.s32 0, %v247
    %v249 = vrot.slane %v244, %v248
    %vm251 = vcmask 261120
    %v253 = vsel %vm251, %v239, 0
    %255 = vmatprep.subr.mxu0 0.0
    %256 = vmatpush1.msra.mxu0 0.0
    %257 = vmatprep.subr.mxu0 0.0
    %258 = vmatpush1.msra.mxu0 0.0
    %259 = vmatprep.subr.mxu0 0.0
    %260 = vmatpush1.msra.mxu0 0.0
    %261 = vmatprep.subr.mxu0 0.0
    %262 = vmatpush1.msra.mxu0 0.0
    %263 = vmatprep.subr.mxu0 0.0
    %264 = vmatpush1.msra.mxu0 0.0
    %265 = vmatprep.subr.mxu0 0.0
    %266 = vmatpush1.msra.mxu0 0.0
    %267 = vmatprep.subr.mxu0 0.0
    %268 = vmatpush1.msra.mxu0 0.0
    %269 = vmatprep.subr.mxu0 0.0
    %270 = vmatpush1.msra.mxu0 0.0
    %271 = vmatprep.subr.mxu0 0.0
    %272 = vmatpush1.msra.mxu0 0.0
    %273 = vmatprep.subr.mxu0 0.0
    %274 = vmatpush1.msra.mxu0 0.0
    %275 = vmatprep.subr.mxu0 0.0
    %276 = vmatpush1.msra.mxu0 0.0
    %277 = vmatprep.subr.mxu0 0.0
    %278 = vmatpush1.msra.mxu0 0.0
    %279 = vmatprep.subr.mxu0 0.0
    %280 = vmatpush1.msra.mxu0 %v243
    %281 = vmatprep.subr.mxu0 0.0
    %282 = vmatpush1.msra.mxu0 %v242
    %283 = vmatprep.subr.mxu0 0.0
    %284 = vmatpush1.msra.mxu0 %v241
    %285 = vmatprep.subr.mxu0 0.0
    %286 = vmatpush1.msra.mxu0 %v240
    %287 = vmatprep.subr.mxu0 0.0
    %288 = vmatpush2.msra.mxu0 0.0
    %289 = vmatprep.subr.mxu0 0.0
    %290 = vmatpush2.msra.mxu0 0.0
    %291 = vmatprep.subr.mxu0 0.0
    %292 = vmatpush2.msra.mxu0 0.0
    %293 = vmatprep.subr.mxu0 0.0
    %294 = vmatpush2.msra.mxu0 0.0
    %295 = vmatprep.subr.mxu0 0.0
    %296 = vmatpush2.msra.mxu0 0.0
    %297 = vmatprep.subr.mxu0 0.0
    %298 = vmatpush2.msra.mxu0 0.0
    %299 = vmatprep.subr.mxu0 0.0
    %300 = vmatpush2.msra.mxu0 0.0
    %301 = vmatprep.subr.mxu0 0.0
    %302 = vmatpush2.msra.mxu0 0.0
    %303 = vmatprep.subr.mxu0 0.0
    %304 = vmatpush2.msra.mxu0 0.0
    %305 = vmatprep.subr.mxu0 0.0
    %306 = vmatpush2.msra.mxu0 0.0
    %307 = vmatprep.subr.mxu0 0.0
    %308 = vmatpush2.msra.mxu0 0.0
    %309 = vmatprep.subr.mxu0 0.0
    %310 = vmatpush2.msra.mxu0 0.0
    %311 = vmatprep.subr.mxu0 0.0
    %312 = vmatpush2.msra.mxu0 0.0
    %313 = vmatprep.subr.mxu0 0.0
    %314 = vmatpush2.msra.mxu0 0.0
    %315 = vmatprep.subr.mxu0 0.0
    %316 = vmatpush2.msra.mxu0 0.0
    %317 = vmatprep.subr.mxu0 0.0
    %318 = vmatpush2.msra.mxu0 0.0
    %319 = vmatprep.mubr.f32.mxu0 0.0
    %320 = vmatmul.mubr.f32.gmra.mxu0 %v253
    %v321 = vpop.f32.mrf.mxu0
    %v322 = vadd.f32 %v249, %v321
    %v323 = vpop.f32.mrf.mxu0
    %324 = vdwg.mxu0
    %v325 = vmax.f32 %v322, 0.0
    %v326 = vld [vmem:[%s7] sm:$0x1]
    %v327 = vld [vmem:[#allocation2] sm:$0x1]
    %v329 = vlaneseq
    %v330 = vshrl.u32 %v329, 7
    %v331 = vsub.s32 0, %v330
    %v332 = vrot.slane %v326, %v331
    %v334 = vmul.f32 %v325, %v332
    %v335 = vsel %vm251, %v334, 0.0
    %336 = vadd.xlane.f32.xlu0 %v335
    %v337 = vpop.xlane.xlu0 %336
    %v339 = vlaneseq
    %v340 = vshrl.u32 %v339, 7
    %v341 = vsub.s32 0, %v340
    %v342 = vrot.slane %v327, %v341
    %v344 = vadd.f32 %v337, %v342
    %vm345 = vcmask 7168
    %346 = vst.msk [vmem:[%s9] sm:$0xff] %vm345, %v344
    // Predicated region
    $region50: #{tpu_custom_call.1} parent=1 // pred_check
      _
    $region51: #{tpu_custom_call.1} parent=1 // pred_check_branch
      %348 = sbr.rel (0) target = $region53
    $region52: #{tpu_custom_call.1} parent=1 // pred_region
      _
    $region53: #{tpu_custom_call.1} parent=1 // pred_fallthru
      _
    // Predicated region
    $region54: #{tpu_custom_call.1} parent=1 // pred_check
      _
    $region55: #{tpu_custom_call.1} parent=1 // pred_check_branch
      %350 = sbr.rel (0) target = $region57
    $region56: #{tpu_custom_call.1} parent=1 // pred_region
      _
    $region57: #{tpu_custom_call.1} parent=1 // pred_fallthru
      _
    %351 = vsyncpa [#allocation4], 1
    %352 = vsyncpa [#allocation6], 1

</llo_original>
